<compile_context>
chip_gen: v7x
topology: tpu7x:2x2x1
jax: 0.10.0
libtpu: 0.0.40
codegen_flags: <defaults>
</compile_context>

<pallas_src>
import jax
import jax.numpy as jnp
from jax import lax
from jax.experimental import pallas as pl
from jax.experimental.pallas import tpu as pltpu


def _round_up(x, m):
    return ((x + m - 1) // m) * m


def _dann_kernel(x_ref, w1_ref, b1_ref, w2_ref, b2_ref, w3_ref, b3_ref, y_ref):
    """One batch tile of the fused 3-layer DANN head.

    x_ref : (TB, IN)       input tile (stored dtype; cast to matmul dtype in-kernel)
    w1_ref: (IN, HID_P)    W1^T, matmul dtype (bf16 or f32), VMEM-resident across grid
    b1_ref: (1, HID_P)     f32
    w2_ref: (HID_P, HID_P) matmul dtype, resident
    b2_ref: (1, HID_P)     f32
    w3_ref: (8, HID_P)     W3 row in row 0, rows 1..7 zero (keeps MXU M-dim >= 8)
    b3_ref: (1, 1)         f32 scalar in SMEM
    y_ref : (1, TB)        f32, batch on the lane axis -> lane-dense store
    """
    mm_dtype = w1_ref.dtype

    # GRL forward is identity (x * 1.0); only the backward pass is reversed.
    x = x_ref[...].astype(mm_dtype)

    # ad_layer1 + ReLU (dropout1 is identity in eval mode). Bias/ReLU in f32.
    h1 = jnp.dot(x, w1_ref[...], preferred_element_type=jnp.float32) + b1_ref[...]
    h1 = jnp.maximum(h1, 0.0).astype(mm_dtype)

    # ad_layer2 + ReLU (dropout2 is identity in eval mode).
    h2 = jnp.dot(h1, w2_ref[...], preferred_element_type=jnp.float32) + b2_ref[...]
    h2 = jnp.maximum(h2, 0.0).astype(mm_dtype)

    # ad_layer3: contract on the hidden (last) axis of BOTH operands so the result lands
    # with the batch on the lane axis: (8, HID_P) x (TB, HID_P)^T -> (8, TB).
    logits8 = lax.dot_general(
        w3_ref[...], h2,
        dimension_numbers=(((1,), (1,)), ((), ())),
        preferred_element_type=jnp.float32,
    )
    logits = logits8[0:1, :] + b3_ref[0, 0]           # (1, TB): only the real row
    y_ref[...] = jax.nn.sigmoid(logits)               # sigmoid on TB real logits only


def prepare_dann_params(w1, b1, w2, b2, w3, b3, *, use_bf16=True):
    """Pad / transpose / cast the Linear params once; cache the result across calls.

    w1: (hidden, in_feature)  b1: (hidden,)
    w2: (hidden, hidden)      b2: (hidden,)
    w3: (1, hidden)           b3: (1,)
    Zero padding is mathematically inert (padded hidden lanes stay exactly 0 after ReLU).
    """
    hid, in_f = w1.shape
    hid_p = _round_up(hid, 128)
    mm_dtype = jnp.bfloat16 if use_bf16 else jnp.float32
    wbytes = 2 if use_bf16 else 4

    def pad2(a, rows, cols, dtype):
        a = jnp.asarray(a, jnp.float32)
        a = jnp.pad(a, ((0, rows - a.shape[0]), (0, cols - a.shape[1])))
        return a.astype(dtype)

    return dict(
        w1t=pad2(w1.T, in_f, hid_p, mm_dtype),                 # (IN, HID_P)
        b1=pad2(b1.reshape(1, -1), 1, hid_p, jnp.float32),     # (1, HID_P)
        w2t=pad2(w2.T, hid_p, hid_p, mm_dtype),                # (HID_P, HID_P)
        b2=pad2(b2.reshape(1, -1), 1, hid_p, jnp.float32),     # (1, HID_P)
        w3r=pad2(w3.reshape(1, -1), 8, hid_p, mm_dtype),       # (8, HID_P), row 0 real
        b3=jnp.asarray(b3, jnp.float32).reshape(1, 1),         # (1, 1) SMEM scalar
        in_feature=in_f, hidden=hid, hid_p=hid_p, wbytes=wbytes,
    )


def adversarial_network_dann_prepared(x, params, *, batch_tile=512):
    """Fused forward of AdversarialNetworkDANN (eval mode) with pre-prepared params.

    x: (bs, in_feature). Returns y: (bs, 1) f32.
    """
    bs, in_f = x.shape
    assert in_f == params["in_feature"], (in_f, params["in_feature"])
    hid = params["hidden"]
    hid_p = params["hid_p"]
    wbytes = params["wbytes"]

    # Batch tiling: one full-size block for small batches (full-dim rule); otherwise a
    # lane/sublane-clean multiple of 128 so the (1, TB) output stays unmasked.
    # NOTE (v7x): for very large batches keep BS_P/TB >= 2 so ("parallel",) can split the
    # grid across the 2 TensorCores; on single-TC v5e/v6e bigger TB is strictly better.
    bs8 = _round_up(bs, 8)
    if bs8 <= batch_tile:
        tb = bs8                                     # single grid step
    else:
        tb = max(128, (batch_tile // 128) * 128)     # multi-step: TB % 128 == 0
    bs_p = _round_up(bs, tb)

    # Only a (small) batch-axis pad of x; the feature axis is left untouched in HBM.
    x_in = x if bs_p == bs else jnp.pad(x, ((0, bs_p - bs), (0, 0)))
    xbytes = x_in.dtype.itemsize

    grid = (bs_p // tb,)

    # VMEM budget: double-buffered x tile + (conservatively double-buffered) resident
    # weights/biases/output + f32 intermediates, with 2x margin; capped under v7x's
    # 64 MiB physical VMEM, floored at the 32 MiB default scoped limit.
    est = (2 * tb * in_f * xbytes
           + 2 * (in_f * hid_p + hid_p * hid_p + 8 * hid_p) * wbytes
           + 4 * hid_p * 4
           + 2 * tb * 4
           + 3 * tb * hid_p * 4)
    vmem_limit = int(min(48 * 1024 * 1024, max(2 * est, 32 * 1024 * 1024)))

    cost = pl.CostEstimate(
        flops=2 * bs * (in_f * hid + hid * hid + hid),
        transcendentals=bs,
        bytes_accessed=int(bs * in_f * xbytes
                           + (in_f * hid + hid * hid + hid) * wbytes
                           + (2 * hid + 1) * 4
                           + bs_p * 4),
    )

    y_row = pl.pallas_call(
        _dann_kernel,
        out_shape=jax.ShapeDtypeStruct((1, bs_p), jnp.float32),
        grid=grid,
        in_specs=[
            pl.BlockSpec((tb, in_f), lambda i: (i, 0)),         # x: tiled over batch
            pl.BlockSpec((in_f, hid_p), lambda i: (0, 0)),      # W1^T: VMEM-resident
            pl.BlockSpec((1, hid_p), lambda i: (0, 0)),         # b1
            pl.BlockSpec((hid_p, hid_p), lambda i: (0, 0)),     # W2^T: VMEM-resident
            pl.BlockSpec((1, hid_p), lambda i: (0, 0)),         # b2
            pl.BlockSpec((8, hid_p), lambda i: (0, 0)),         # W3 rows: VMEM-resident
            pl.BlockSpec(memory_space=pltpu.MemorySpace.SMEM),  # b3 scalar
        ],
        out_specs=pl.BlockSpec((1, tb), lambda i: (0, i)),      # batch on lane axis
        compiler_params=pltpu.CompilerParams(
            # Batch axis is embarrassingly parallel -> megacore sharding on v7x,
            # harmless on single-TC v5e/v6e.
            dimension_semantics=("parallel",),
            vmem_limit_bytes=vmem_limit,
        ),
        cost_estimate=cost,
    )(x_in, params["w1t"], params["b1"], params["w2t"], params["b2"],
      params["w3r"], params["b3"])

    return y_row[0, :bs].reshape(bs, 1)


def adversarial_network_dann(x, w1, b1, w2, b2, w3, b3, *, use_bf16=True, batch_tile=512):
    """Convenience wrapper: prepare params (prefer caching this step) and run."""
    params = prepare_dann_params(w1, b1, w2, b2, w3, b3, use_bf16=use_bf16)
    return adversarial_network_dann_prepared(x, params, batch_tile=batch_tile)


if __name__ == "__main__":
    # Small shapes consistent with the module: x is (batch, in_feature).
    bs, in_feature, hidden_size = 16, 32, 64

    key = jax.random.PRNGKey(0)
    k_x, k_w1, k_b1, k_w2, k_b2, k_w3, k_b3, k_x2 = jax.random.split(key, 8)

    def xavier(k, shape):
        fan_out, fan_in = shape
        std = (2.0 / (fan_in + fan_out)) ** 0.5
        return std * jax.random.normal(k, shape, dtype=jnp.float32)

    x = jax.random.normal(k_x, (bs, in_feature), dtype=jnp.float32)
    w1 = xavier(k_w1, (hidden_size, in_feature))
    b1 = 0.1 * jax.random.normal(k_b1, (hidden_size,), dtype=jnp.float32)
    w2 = xavier(k_w2, (hidden_size, hidden_size))
    b2 = 0.1 * jax.random.normal(k_b2, (hidden_size,), dtype=jnp.float32)
    w3 = xavier(k_w3, (1, hidden_size))
    b3 = 0.1 * jax.random.normal(k_b3, (1,), dtype=jnp.float32)

    # Pure-JAX reference (eval mode: dropout = identity, GRL forward = identity).
    def reference(xx):
        h1 = jnp.maximum(xx @ w1.T + b1, 0.0)
        h2 = jnp.maximum(h1 @ w2.T + b2, 0.0)
        return jax.nn.sigmoid(h2 @ w3.T + b3)

    params_f32 = prepare_dann_params(w1, b1, w2, b2, w3, b3, use_bf16=False)
    params_bf16 = prepare_dann_params(w1, b1, w2, b2, w3, b3, use_bf16=True)

    # --- Test 1: small batch, single grid step: f32 path (tight) + bf16 path (loose).
    y_f32 = adversarial_network_dann_prepared(x, params_f32)
    y_bf16 = adversarial_network_dann_prepared(x, params_bf16)
    jax.block_until_ready((y_f32, y_bf16))
    y_ref = reference(x)
    assert y_f32.shape == (bs, 1), y_f32.shape
    assert jnp.allclose(y_f32, y_ref, atol=1e-4, rtol=1e-4), \
        float(jnp.max(jnp.abs(y_f32 - y_ref)))
    assert jnp.allclose(y_bf16, y_ref, atol=2e-2, rtol=2e-2), \
        float(jnp.max(jnp.abs(y_bf16 - y_ref)))

    # --- Test 2: batch not a tile multiple -> multi-step grid + batch padding path.
    bs2 = 272
    x2 = jax.random.normal(k_x2, (bs2, in_feature), dtype=jnp.float32)
    y2_f32 = adversarial_network_dann_prepared(x2, params_f32, batch_tile=128)
    y2_bf16 = adversarial_network_dann_prepared(x2, params_bf16, batch_tile=128)
    jax.block_until_ready((y2_f32, y2_bf16))
    y2_ref = reference(x2)
    assert y2_f32.shape == (bs2, 1), y2_f32.shape
    assert jnp.allclose(y2_f32, y2_ref, atol=1e-4, rtol=1e-4), \
        float(jnp.max(jnp.abs(y2_f32 - y2_ref)))
    assert jnp.allclose(y2_bf16, y2_ref, atol=2e-2, rtol=2e-2), \
        float(jnp.max(jnp.abs(y2_bf16 - y2_ref)))

    print("KERNEL_OK")
</pallas_src>

<mosaic_0001>
module attributes {stable_mosaic.version = 11 : i64} {
  func.func @_dann_kernel(%arg0: i32, %arg1: memref<16x32xf32, #tpu.memory_space<vmem>>, %arg2: memref<32x128xf32, #tpu.memory_space<vmem>>, %arg3: memref<1x128xf32, #tpu.memory_space<vmem>>, %arg4: memref<128x128xf32, #tpu.memory_space<vmem>>, %arg5: memref<1x128xf32, #tpu.memory_space<vmem>>, %arg6: memref<8x128xf32, #tpu.memory_space<vmem>>, %arg7: memref<1x1xf32, #tpu.memory_space<smem>>, %arg8: memref<1x16xf32, #tpu.memory_space<vmem>>) attributes {dimension_semantics = [#tpu.dimension_semantics<parallel>], iteration_bounds = array<i64: 1>, scalar_prefetch = 0 : i64, scratch_operands = 0 : i64, tpu.core_type = #tpu.core_type<tc>, window_params = [{transform_indices = @transform_0, window_bounds = array<i64: 16, 32>}, {pipeline_mode = #tpu.pipeline_mode<synchronous>, transform_indices = @transform_1, window_bounds = array<i64: 32, 128>}, {pipeline_mode = #tpu.pipeline_mode<synchronous>, transform_indices = @transform_2, window_bounds = array<i64: 1, 128>}, {pipeline_mode = #tpu.pipeline_mode<synchronous>, transform_indices = @transform_3, window_bounds = array<i64: 128, 128>}, {pipeline_mode = #tpu.pipeline_mode<synchronous>, transform_indices = @transform_4, window_bounds = array<i64: 1, 128>}, {pipeline_mode = #tpu.pipeline_mode<synchronous>, transform_indices = @transform_5, window_bounds = array<i64: 8, 128>}, {transform_indices = @transform_6, window_bounds = array<i64: 1, 1>}, {transform_indices = @transform_7, window_bounds = array<i64: 1, 16>}]} {
    %c0 = arith.constant 0 : index
    %c0_0 = arith.constant 0 : index
    %0 = vector.load %arg1[%c0, %c0_0] : memref<16x32xf32, #tpu.memory_space<vmem>>, vector<16x32xf32>
    %c0_1 = arith.constant 0 : index
    %c0_2 = arith.constant 0 : index
    %1 = vector.load %arg2[%c0_1, %c0_2] : memref<32x128xf32, #tpu.memory_space<vmem>>, vector<32x128xf32>
    %cst = arith.constant dense<0.000000e+00> : vector<16x128xf32>
    %2 = tpu.matmul %0, %1, %cst {dimension_numbers = #tpu.dot_dimension_numbers<[1], [0], [0], [1], [0, 0, 1, 1], [], []>} : vector<16x32xf32>, vector<32x128xf32>, vector<16x128xf32> -> vector<16x128xf32>
    %c0_3 = arith.constant 0 : index
    %c0_4 = arith.constant 0 : index
    %3 = vector.load %arg3[%c0_3, %c0_4] : memref<1x128xf32, #tpu.memory_space<vmem>>, vector<1x128xf32>
    %4 = vector.broadcast %3 : vector<1x128xf32> to vector<16x128xf32>
    %5 = arith.addf %2, %4 : vector<16x128xf32>
    %cst_5 = arith.constant 0.000000e+00 : f32
    %6 = vector.broadcast %cst_5 : f32 to vector<16x128xf32>
    %7 = arith.maximumf %5, %6 : vector<16x128xf32>
    %c0_6 = arith.constant 0 : index
    %c0_7 = arith.constant 0 : index
    %8 = vector.load %arg4[%c0_6, %c0_7] : memref<128x128xf32, #tpu.memory_space<vmem>>, vector<128x128xf32>
    %cst_8 = arith.constant dense<0.000000e+00> : vector<16x128xf32>
    %9 = tpu.matmul %7, %8, %cst_8 {dimension_numbers = #tpu.dot_dimension_numbers<[1], [0], [0], [1], [0, 0, 1, 1], [], []>} : vector<16x128xf32>, vector<128x128xf32>, vector<16x128xf32> -> vector<16x128xf32>
    %c0_9 = arith.constant 0 : index
    %c0_10 = arith.constant 0 : index
    %10 = vector.load %arg5[%c0_9, %c0_10] : memref<1x128xf32, #tpu.memory_space<vmem>>, vector<1x128xf32>
    %11 = vector.broadcast %10 : vector<1x128xf32> to vector<16x128xf32>
    %12 = arith.addf %9, %11 : vector<16x128xf32>
    %cst_11 = arith.constant 0.000000e+00 : f32
    %13 = vector.broadcast %cst_11 : f32 to vector<16x128xf32>
    %14 = arith.maximumf %12, %13 : vector<16x128xf32>
    %c0_12 = arith.constant 0 : index
    %c0_13 = arith.constant 0 : index
    %15 = vector.load %arg6[%c0_12, %c0_13] : memref<8x128xf32, #tpu.memory_space<vmem>>, vector<8x128xf32>
    %cst_14 = arith.constant dense<0.000000e+00> : vector<8x16xf32>
    %16 = tpu.matmul %15, %14, %cst_14 {dimension_numbers = #tpu.dot_dimension_numbers<[1], [1], [0], [0], [0, 0, 1, 0], [], []>} : vector<8x128xf32>, vector<16x128xf32>, vector<8x16xf32> -> vector<8x16xf32>
    %17 = vector.extract_strided_slice %16 {offsets = [0, 0], sizes = [1, 16], strides = [1, 1]} : vector<8x16xf32> to vector<1x16xf32>
    %c0_15 = arith.constant 0 : index
    %c0_16 = arith.constant 0 : index
    %18 = memref.load %arg7[%c0_15, %c0_16] : memref<1x1xf32, #tpu.memory_space<smem>>
    %19 = vector.broadcast %18 : f32 to vector<1x16xf32>
    %20 = arith.addf %17, %19 : vector<1x16xf32>
    %21 = arith.negf %20 : vector<1x16xf32>
    %22 = math.exp %21 : vector<1x16xf32>
    %cst_17 = arith.constant 1.000000e+00 : f32
    %23 = vector.broadcast %cst_17 : f32 to vector<1x16xf32>
    %24 = arith.addf %23, %22 : vector<1x16xf32>
    %25 = arith.divf %23, %24 : vector<1x16xf32>
    %c0_18 = arith.constant 0 : index
    %c0_19 = arith.constant 0 : index
    %26 = vector.load %arg8[%c0_18, %c0_19] : memref<1x16xf32, #tpu.memory_space<vmem>>, vector<1x16xf32>
    tpu.vector_store %arg8[%c0_18, %c0_19], %25 {strides = array<i32>} : memref<1x16xf32, #tpu.memory_space<vmem>>, vector<1x16xf32>,
    return
  }
  func.func @transform_0(%arg0: i32) -> (i32, i32) {
    %c0_i32 = arith.constant 0 : i32
    %c0_i32_0 = arith.constant 0 : i32
    return %arg0, %c0_i32 : i32, i32
  }
  func.func @transform_1(%arg0: i32) -> (i32, i32) {
    %c0_i32 = arith.constant 0 : i32
    %c0_i32_0 = arith.constant 0 : i32
    %c0_i32_1 = arith.constant 0 : i32
    return %c0_i32, %c0_i32_0 : i32, i32
  }
  func.func @transform_2(%arg0: i32) -> (i32, i32) {
    %c0_i32 = arith.constant 0 : i32
    %c0_i32_0 = arith.constant 0 : i32
    %c0_i32_1 = arith.constant 0 : i32
    return %c0_i32, %c0_i32_0 : i32, i32
  }
  func.func @transform_3(%arg0: i32) -> (i32, i32) {
    %c0_i32 = arith.constant 0 : i32
    %c0_i32_0 = arith.constant 0 : i32
    %c0_i32_1 = arith.constant 0 : i32
    return %c0_i32, %c0_i32_0 : i32, i32
  }
  func.func @transform_4(%arg0: i32) -> (i32, i32) {
    %c0_i32 = arith.constant 0 : i32
    %c0_i32_0 = arith.constant 0 : i32
    %c0_i32_1 = arith.constant 0 : i32
    return %c0_i32, %c0_i32_0 : i32, i32
  }
  func.func @transform_5(%arg0: i32) -> (i32, i32) {
    %c0_i32 = arith.constant 0 : i32
    %c0_i32_0 = arith.constant 0 : i32
    %c0_i32_1 = arith.constant 0 : i32
    return %c0_i32, %c0_i32_0 : i32, i32
  }
  func.func @transform_6(%arg0: i32) -> (i32, i32) {
    %c0_i32 = arith.constant 0 : i32
    %c0_i32_0 = arith.constant 0 : i32
    %c0_i32_1 = arith.constant 0 : i32
    return %c0_i32, %c0_i32_0 : i32, i32
  }
  func.func @transform_7(%arg0: i32) -> (i32, i32) {
    %c0_i32 = arith.constant 0 : i32
    %c0_i32_0 = arith.constant 0 : i32
    return %c0_i32, %arg0 : i32, i32
  }
}

</mosaic_0001>

<llo_original>
// kernel: tpu_custom_call.1
$region0: #{tpu_custom_call.1}
  #allocation0 [shape = 'u32[]', space=smem, size = 0x4, offset = 0x4, fixed_abs, tag = 'smem constant byte address 0x4 - core index']
  #allocation1 [shape = 'u32[144,128]{1,0:T(1,128)}', space=vmem, size = 0x12000, scoped, tag = 'internal scratch']
  #allocation2 [shape = 'f32[1,1]{1,0:T(1,128)S(6)}', space=smem, size = 0x200, scoped, tag = 'scoped memory for tpu_custom_call.1']
  %s0 = inlined_call_operand.hbm [shape: f32[16,32], index: 0, kind: input, shape index: {}]
  %s1 = inlined_call_operand.hbm [shape: f32[32,128], index: 1, kind: input, shape index: {}]
  %s2 = inlined_call_operand.vmem [shape: f32[1,128], index: 2, kind: input, shape index: {}]
  %s3 = inlined_call_operand.hbm [shape: f32[128,128], index: 3, kind: input, shape index: {}]
  %s4 = inlined_call_operand.vmem [shape: f32[1,128], index: 4, kind: input, shape index: {}]
  %s5 = inlined_call_operand.vmem [shape: f32[8,128], index: 5, kind: input, shape index: {}]
  %s6 = inlined_call_operand.<no memory space> [shape: f32[1,1], index: 6, kind: input, shape index: {}]
  %s7 = inlined_call_operand.hbm [shape: f32[1,16], index: 7, kind: output, shape index: {}]
  %s8 = sld [smem:[#allocation0]]
  $region50: #{tpu_custom_call.1} parent=0
    _
  %s10 = ssub.s32 1, %s8
  %s11 = scalar_select 0, %s10, %s8
  %12 = sst [smem:[#allocation2]] %s6
  $region1: #{tpu_custom_call.1} parent=0
    #allocation3 [shape = 'u8[8192]{0}', space=vmem, size = 0x2000, scoped, tag = 'input window, operand 0, single buffered']
    #allocation4 [shape = 's32[1]{0}', space=sflag, size = 0x4, scoped, tag = 'scoped memory for tpu_custom_call.1']
    #allocation5 [shape = 's32[1]{0}', space=sflag, size = 0x4, scoped, tag = 'scoped memory for tpu_custom_call.1']
    #allocation6 [shape = 'u8[16384]{0}', space=vmem, size = 0x4000, scoped, tag = 'input window, operand 1, single buffered']
    #allocation7 [shape = 's32[1]{0}', space=sflag, size = 0x4, scoped, tag = 'scoped memory for tpu_custom_call.1']
    #allocation8 [shape = 'u8[65536]{0}', space=vmem, size = 0x10000, scoped, tag = 'input window, operand 3, single buffered']
    #allocation9 [shape = 'u8[512]{0}', space=vmem, size = 0x400, scoped, tag = 'output window, operand 0, single buffered']
    %13 = vsyncpa [#allocation4], 0
    %14 = vsyncpa [#allocation7], 0
    %15 = vsyncpa [#allocation5], 0
    // Predicated region
    $region2: #{tpu_custom_call.1} parent=1 // pred_check
      _
    $region3: #{tpu_custom_call.1} parent=1 // pred_check_branch
      %17 = sbr.rel (0) target = $region5
    $region4: #{tpu_custom_call.1} parent=1 // pred_region
      %s19 = ssub.s32 256, 256
      %20 = vsyncadd [#allocation4], %s19
      %s21 = sshll.u32 [#allocation3], 4
      %s22 = int_to_ptr.vmem [resolvable:$true] %s21
      %27 = dma.hbm_to_vmem [thread:$0]  %s0, 256, %s22, [#allocation4], 128, 128, 8
    $region5: #{tpu_custom_call.1} parent=1 // pred_fallthru
      _
    // Predicated region
    $region6: #{tpu_custom_call.1} parent=1 // pred_check
      _
    $region7: #{tpu_custom_call.1} parent=1 // pred_check_branch
      %29 = sbr.rel (0) target = $region9
    $region8: #{tpu_custom_call.1} parent=1 // pred_region
      %s31 = ssub.s32 512, 512
      %32 = vsyncadd [#allocation7], %s31
      %s33 = sshll.u32 [#allocation6], 4
      %s34 = int_to_ptr.vmem [resolvable:$true] %s33
      %39 = dma.hbm_to_vmem [thread:$0]  %s1, 512, %s34, [#allocation7], 128, 128, 8
    $region9: #{tpu_custom_call.1} parent=1 // pred_fallthru
      _
    // Predicated region
    $region10: #{tpu_custom_call.1} parent=1 // pred_check
      _
    $region11: #{tpu_custom_call.1} parent=1 // pred_check_branch
      %41 = sbr.rel (0) target = $region13
    $region12: #{tpu_custom_call.1} parent=1 // pred_region
      _
    $region13: #{tpu_custom_call.1} parent=1 // pred_fallthru
      _
    // Predicated region
    $region14: #{tpu_custom_call.1} parent=1 // pred_check
      _
    $region15: #{tpu_custom_call.1} parent=1 // pred_check_branch
      %43 = sbr.rel (0) target = $region17
    $region16: #{tpu_custom_call.1} parent=1 // pred_region
      %s45 = ssub.s32 2048, 2048
      %46 = vsyncadd [#allocation7], %s45
      %s47 = sshll.u32 [#allocation8], 4
      %s48 = int_to_ptr.vmem [resolvable:$true] %s47
      %53 = dma.hbm_to_vmem [thread:$0]  %s3, 2048, %s48, [#allocation7], 128, 128, 8
    $region17: #{tpu_custom_call.1} parent=1 // pred_fallthru
      _
    // Predicated region
    $region18: #{tpu_custom_call.1} parent=1 // pred_check
      _
    $region19: #{tpu_custom_call.1} parent=1 // pred_check_branch
      %55 = sbr.rel (0) target = $region21
    $region20: #{tpu_custom_call.1} parent=1 // pred_region
      _
    $region21: #{tpu_custom_call.1} parent=1 // pred_fallthru
      _
    // Predicated region
    $region22: #{tpu_custom_call.1} parent=1 // pred_check
      _
    $region23: #{tpu_custom_call.1} parent=1 // pred_check_branch
      %57 = sbr.rel (0) target = $region25
    $region24: #{tpu_custom_call.1} parent=1 // pred_region
      _
    $region25: #{tpu_custom_call.1} parent=1 // pred_fallthru
      _
    // Predicated region
    $region26: #{tpu_custom_call.1} parent=1 // pred_check
      _
    $region27: #{tpu_custom_call.1} parent=1 // pred_check_branch
      %59 = sbr.rel (0) target = $region29
    $region28: #{tpu_custom_call.1} parent=1 // pred_region
      _
    $region29: #{tpu_custom_call.1} parent=1 // pred_fallthru
      _
    // Predicated region
    $region30: #{tpu_custom_call.1} parent=1 // pred_check
      _
    $region31: #{tpu_custom_call.1} parent=1 // pred_check_branch
      %61 = sbr.rel (0) target = $region33
    $region32: #{tpu_custom_call.1} parent=1 // pred_region
      %62 = dma.done [#allocation4], 256
    $region33: #{tpu_custom_call.1} parent=1 // pred_fallthru
      _
    // Predicated region
    $region34: #{tpu_custom_call.1} parent=1 // pred_check
      _
    $region35: #{tpu_custom_call.1} parent=1 // pred_check_branch
      %64 = sbr.rel (0) target = $region37
    $region36: #{tpu_custom_call.1} parent=1 // pred_region
      %65 = dma.done [#allocation7], 512
    $region37: #{tpu_custom_call.1} parent=1 // pred_fallthru
      _
    // Predicated region
    $region38: #{tpu_custom_call.1} parent=1 // pred_check
      _
    $region39: #{tpu_custom_call.1} parent=1 // pred_check_branch
      %67 = sbr.rel (0) target = $region41
    $region40: #{tpu_custom_call.1} parent=1 // pred_region
      %68 = dma.done [#allocation7], 2048
    $region41: #{tpu_custom_call.1} parent=1 // pred_fallthru
      _
    %v69 = vld [vmem:[#allocation3] sm:$0xff]
    %v70 = vld [vmem:[#allocation3 + $0x8] sm:$0xff]
    %v71 = vld [vmem:[#allocation6] sm:$0xff]
    %v72 = vld [vmem:[#allocation6 + $0x8] sm:$0xff]
    %v73 = vld [vmem:[#allocation6 + $0x10] sm:$0xff]
    %v74 = vld [vmem:[#allocation6 + $0x18] sm:$0xff]
    %v75 = vld [vmem:[%s2] sm:$0x1]
    %v77 = vlaneseq
    %v78 = vshrl.u32 %v77, 7
    %v79 = vsub.s32 0, %v78
    %v80 = vrot.slane %v75, %v79
    %vm82 = vcmask 261120
    %v84 = vsel %vm82, %v69, 0
    %v87 = vsel %vm82, %v70, 0
    %89 = vmatprep.subr.mxu0 0.0
    %90 = vmatpush1.msra.mxu0 %v71
    %91 = vmatprep.subr.mxu0 0.0
    %92 = vmatpush1.msra.mxu0 %v72
    %93 = vmatprep.subr.mxu0 0.0
    %94 = vmatpush1.msra.mxu0 %v73
    %95 = vmatprep.subr.mxu0 0.0
    %96 = vmatpush1.msra.mxu0 %v74
    %97 = vmatprep.subr.mxu0 0.0
    %98 = vmatpush1.msra.mxu0 0.0
    %99 = vmatprep.subr.mxu0 0.0
    %100 = vmatpush1.msra.mxu0 0.0
    %101 = vmatprep.subr.mxu0 0.0
    %102 = vmatpush1.msra.mxu0 0.0
    %103 = vmatprep.subr.mxu0 0.0
    %104 = vmatpush1.msra.mxu0 0.0
    %105 = vmatprep.subr.mxu0 0.0
    %106 = vmatpush1.msra.mxu0 0.0
    %107 = vmatprep.subr.mxu0 0.0
    %108 = vmatpush1.msra.mxu0 0.0
    %109 = vmatprep.subr.mxu0 0.0
    %110 = vmatpush1.msra.mxu0 0.0
    %111 = vmatprep.subr.mxu0 0.0
    %112 = vmatpush1.msra.mxu0 0.0
    %113 = vmatprep.subr.mxu0 0.0
    %114 = vmatpush1.msra.mxu0 0.0
    %115 = vmatprep.subr.mxu0 0.0
    %116 = vmatpush1.msra.mxu0 0.0
    %117 = vmatprep.subr.mxu0 0.0
    %118 = vmatpush1.msra.mxu0 0.0
    %119 = vmatprep.subr.mxu0 0.0
    %120 = vmatpush1.msra.mxu0 0.0
    %121 = vmatprep.subr.mxu0 0.0
    %122 = vmatpush1.msra.mxu0 0.0
    %123 = vmatprep.subr.mxu0 0.0
    %124 = vmatpush1.msra.mxu0 0.0
    %125 = vmatprep.subr.mxu0 0.0
    %126 = vmatpush1.msra.mxu0 0.0
    %127 = vmatprep.subr.mxu0 0.0
    %128 = vmatpush1.msra.mxu0 0.0
    %129 = vmatprep.subr.mxu0 0.0
    %130 = vmatpush1.msra.mxu0 0.0
    %131 = vmatprep.subr.mxu0 0.0
    %132 = vmatpush1.msra.mxu0 0.0
    %133 = vmatprep.subr.mxu0 0.0
    %134 = vmatpush1.msra.mxu0 0.0
    %135 = vmatprep.subr.mxu0 0.0
    %136 = vmatpush1.msra.mxu0 0.0
    %137 = vmatprep.subr.mxu0 0.0
    %138 = vmatpush1.msra.mxu0 0.0
    %139 = vmatprep.subr.mxu0 0.0
    %140 = vmatpush1.msra.mxu0 0.0
    %141 = vmatprep.subr.mxu0 0.0
    %142 = vmatpush1.msra.mxu0 0.0
    %143 = vmatprep.subr.mxu0 0.0
    %144 = vmatpush1.msra.mxu0 0.0
    %145 = vmatprep.subr.mxu0 0.0
    %146 = vmatpush1.msra.mxu0 0.0
    %147 = vmatprep.subr.mxu0 0.0
    %148 = vmatpush1.msra.mxu0 0.0
    %149 = vmatprep.subr.mxu0 0.0
    %150 = vmatpush1.msra.mxu0 0.0
    %151 = vmatprep.subr.mxu0 0.0
    %152 = vmatpush1.msra.mxu0 0.0
    %153 = vmatprep.mubr.f32.mxu0 0.0
    %154 = vmatmul.mubr.f32.gmra.mrb[0].mxu0 %v84
    %v155 = vpop.f32.mrb[0].mxu0
    %v156 = vadd.f32 %v80, %v155
    %v157 = vpop.f32.mrb[0].mxu0
    %158 = vmatprep.mubr.f32.mxu0 0.0
    %159 = vmatmul.mubr.f32.gmra.mrb[0].mxu0 %v87
    %v160 = vpop.f32.mrb[0].mxu0
    %v161 = vadd.f32 %v80, %v160
    %v162 = vpop.f32.mrb[0].mxu0
    %163 = vdwg.mxu0
    %v164 = vmax.f32 %v156, 0.0
    %v165 = vmax.f32 %v161, 0.0
    %v166 = vld [vmem:[#allocation8] sm:$0xff]
    %v167 = vld [vmem:[#allocation8 + $0x8] sm:$0xff]
    %v168 = vld [vmem:[#allocation8 + $0x10] sm:$0xff]
    %v169 = vld [vmem:[#allocation8 + $0x18] sm:$0xff]
    %v170 = vld [vmem:[#allocation8 + $0x20] sm:$0xff]
    %v171 = vld [vmem:[#allocation8 + $0x28] sm:$0xff]
    %v172 = vld [vmem:[#allocation8 + $0x30] sm:$0xff]
    %v173 = vld [vmem:[#allocation8 + $0x38] sm:$0xff]
    %v174 = vld [vmem:[#allocation8 + $0x40] sm:$0xff]
    %v175 = vld [vmem:[#allocation8 + $0x48] sm:$0xff]
    %v176 = vld [vmem:[#allocation8 + $0x50] sm:$0xff]
    %v177 = vld [vmem:[#allocation8 + $0x58] sm:$0xff]
    %v178 = vld [vmem:[#allocation8 + $0x60] sm:$0xff]
    %v179 = vld [vmem:[#allocation8 + $0x68] sm:$0xff]
    %v180 = vld [vmem:[#allocation8 + $0x70] sm:$0xff]
    %v181 = vld [vmem:[#allocation8 + $0x78] sm:$0xff]
    %v182 = vld [vmem:[%s4] sm:$0x1]
    %v184 = vlaneseq
    %v185 = vshrl.u32 %v184, 7
    %v186 = vsub.s32 0, %v185
    %v187 = vrot.slane %v182, %v186
    %189 = vmatprep.subr.mxu0 0.0
    %190 = vmatpush1.msra.mxu0 %v166
    %191 = vmatprep.subr.mxu0 0.0
    %192 = vmatpush1.msra.mxu0 %v167
    %193 = vmatprep.subr.mxu0 0.0
    %194 = vmatpush1.msra.mxu0 %v168
    %195 = vmatprep.subr.mxu0 0.0
    %196 = vmatpush1.msra.mxu0 %v169
    %197 = vmatprep.subr.mxu0 0.0
    %198 = vmatpush1.msra.mxu0 %v170
    %199 = vmatprep.subr.mxu0 0.0
    %200 = vmatpush1.msra.mxu0 %v171
    %201 = vmatprep.subr.mxu0 0.0
    %202 = vmatpush1.msra.mxu0 %v172
    %203 = vmatprep.subr.mxu0 0.0
    %204 = vmatpush1.msra.mxu0 %v173
    %205 = vmatprep.subr.mxu0 0.0
    %206 = vmatpush1.msra.mxu0 %v174
    %207 = vmatprep.subr.mxu0 0.0
    %208 = vmatpush1.msra.mxu0 %v175
    %209 = vmatprep.subr.mxu0 0.0
    %210 = vmatpush1.msra.mxu0 %v176
    %211 = vmatprep.subr.mxu0 0.0
    %212 = vmatpush1.msra.mxu0 %v177
    %213 = vmatprep.subr.mxu0 0.0
    %214 = vmatpush1.msra.mxu0 %v178
    %215 = vmatprep.subr.mxu0 0.0
    %216 = vmatpush1.msra.mxu0 %v179
    %217 = vmatprep.subr.mxu0 0.0
    %218 = vmatpush1.msra.mxu0 %v180
    %219 = vmatprep.subr.mxu0 0.0
    %220 = vmatpush1.msra.mxu0 %v181
    %221 = vmatprep.subr.mxu0 0.0
    %222 = vmatpush1.msra.mxu0 0.0
    %223 = vmatprep.subr.mxu0 0.0
    %224 = vmatpush1.msra.mxu0 0.0
    %225 = vmatprep.subr.mxu0 0.0
    %226 = vmatpush1.msra.mxu0 0.0
    %227 = vmatprep.subr.mxu0 0.0
    %228 = vmatpush1.msra.mxu0 0.0
    %229 = vmatprep.subr.mxu0 0.0
    %230 = vmatpush1.msra.mxu0 0.0
    %231 = vmatprep.subr.mxu0 0.0
    %232 = vmatpush1.msra.mxu0 0.0
    %233 = vmatprep.subr.mxu0 0.0
    %234 = vmatpush1.msra.mxu0 0.0
    %235 = vmatprep.subr.mxu0 0.0
    %236 = vmatpush1.msra.mxu0 0.0
    %237 = vmatprep.subr.mxu0 0.0
    %238 = vmatpush1.msra.mxu0 0.0
    %239 = vmatprep.subr.mxu0 0.0
    %240 = vmatpush1.msra.mxu0 0.0
    %241 = vmatprep.subr.mxu0 0.0
    %242 = vmatpush1.msra.mxu0 0.0
    %243 = vmatprep.subr.mxu0 0.0
    %244 = vmatpush1.msra.mxu0 0.0
    %245 = vmatprep.subr.mxu0 0.0
    %246 = vmatpush1.msra.mxu0 0.0
    %247 = vmatprep.subr.mxu0 0.0
    %248 = vmatpush1.msra.mxu0 0.0
    %249 = vmatprep.subr.mxu0 0.0
    %250 = vmatpush1.msra.mxu0 0.0
    %251 = vmatprep.subr.mxu0 0.0
    %252 = vmatpush1.msra.mxu0 0.0
    %253 = vmatprep.mubr.f32.mxu0 0.0
    %254 = vmatmul.mubr.f32.gmra.mrb[0].mxu0 %v164
    %v255 = vpop.f32.mrb[0].mxu0
    %v256 = vadd.f32 %v187, %v255
    %v257 = vpop.f32.mrb[0].mxu0
    %258 = vmatprep.mubr.f32.mxu0 0.0
    %259 = vmatmul.mubr.f32.gmra.mrb[0].mxu0 %v165
    %v260 = vpop.f32.mrb[0].mxu0
    %v261 = vadd.f32 %v187, %v260
    %v262 = vpop.f32.mrb[0].mxu0
    %263 = vdwg.mxu0
    %v264 = vmax.f32 %v256, 0.0
    %v265 = vmax.f32 %v261, 0.0
    %v266 = vld [vmem:[%s5] sm:$0xff]
    %267 = vmatprep.subr.mxu0 0.0
    %268 = vmatpush1.xpose.msra.mxu0 %v264
    %269 = vmatprep.subr.mxu0 0.0
    %270 = vmatpush1.xpose.msra.mxu0 %v265
    %271 = vmatprep.subr.mxu0 0.0
    %272 = vmatpush1.xpose.msra.mxu0 0.0
    %273 = vmatprep.subr.mxu0 0.0
    %274 = vmatpush1.xpose.msra.mxu0 0.0
    %275 = vmatprep.subr.mxu0 0.0
    %276 = vmatpush1.xpose.msra.mxu0 0.0
    %277 = vmatprep.subr.mxu0 0.0
    %278 = vmatpush1.xpose.msra.mxu0 0.0
    %279 = vmatprep.subr.mxu0 0.0
    %280 = vmatpush1.xpose.msra.mxu0 0.0
    %281 = vmatprep.subr.mxu0 0.0
    %282 = vmatpush1.xpose.msra.mxu0 0.0
    %283 = vmatprep.subr.mxu0 0.0
    %284 = vmatpush1.xpose.msra.mxu0 0.0
    %285 = vmatprep.subr.mxu0 0.0
    %286 = vmatpush1.xpose.msra.mxu0 0.0
    %287 = vmatprep.subr.mxu0 0.0
    %288 = vmatpush1.xpose.msra.mxu0 0.0
    %289 = vmatprep.subr.mxu0 0.0
    %290 = vmatpush1.xpose.msra.mxu0 0.0
    %291 = vmatprep.subr.mxu0 0.0
    %292 = vmatpush1.xpose.msra.mxu0 0.0
    %293 = vmatprep.subr.mxu0 0.0
    %294 = vmatpush1.xpose.msra.mxu0 0.0
    %295 = vmatprep.subr.mxu0 0.0
    %296 = vmatpush1.xpose.msra.mxu0 0.0
    %297 = vmatprep.subr.mxu0 0.0
    %298 = vmatpush1.xpose.msra.mxu0 0.0
    %299 = vmatprep.subr.mxu0 0.0
    %300 = vmatpush1.xpose.msra.mxu0 0.0
    %301 = vmatprep.subr.mxu0 0.0
    %302 = vmatpush1.xpose.msra.mxu0 0.0
    %303 = vmatprep.subr.mxu0 0.0
    %304 = vmatpush1.xpose.msra.mxu0 0.0
    %305 = vmatprep.subr.mxu0 0.0
    %306 = vmatpush1.xpose.msra.mxu0 0.0
    %307 = vmatprep.subr.mxu0 0.0
    %308 = vmatpush1.xpose.msra.mxu0 0.0
    %309 = vmatprep.subr.mxu0 0.0
    %310 = vmatpush1.xpose.msra.mxu0 0.0
    %311 = vmatprep.subr.mxu0 0.0
    %312 = vmatpush1.xpose.msra.mxu0 0.0
    %313 = vmatprep.subr.mxu0 0.0
    %314 = vmatpush1.xpose.msra.mxu0 0.0
    %315 = vmatprep.subr.mxu0 0.0
    %316 = vmatpush1.xpose.msra.mxu0 0.0
    %317 = vmatprep.subr.mxu0 0.0
    %318 = vmatpush1.xpose.msra.mxu0 0.0
    %319 = vmatprep.subr.mxu0 0.0
    %320 = vmatpush1.xpose.msra.mxu0 0.0
    %321 = vmatprep.subr.mxu0 0.0
    %322 = vmatpush1.xpose.msra.mxu0 0.0
    %323 = vmatprep.subr.mxu0 0.0
    %324 = vmatpush1.xpose.msra.mxu0 0.0
    %325 = vmatprep.subr.mxu0 0.0
    %326 = vmatpush1.xpose.msra.mxu0 0.0
    %327 = vmatprep.subr.mxu0 0.0
    %328 = vmatpush1.xpose.msra.mxu0 0.0
    %329 = vmatprep.subr.mxu0 0.0
    %330 = vmatpush1.xpose.msra.mxu0 0.0
    %331 = vmatprep.mubr.f32.mxu0 0.0
    %332 = vmatmul.mubr.f32.gmra.mrb[0].mxu0 %v266
    %v333 = vpop.f32.mrb[0].mxu0
    %v334 = vadd.f32 0.0, %v333
    %v335 = vpop.f32.mrb[0].mxu0
    %336 = vdwg.mxu0
    %s337 = sld [smem:[#allocation2]]
    %v338 = vstv %s337
    %v339 = vadd.f32 %v334, %v338
    %v340 = vxor.u32 %v339, 2147483648
    %v341 = vmul.f32 %v340, 1.442695
    %v342 = vpow.pop %v341
    %v343 = vadd.f32 %v342, 1.0
    %v344 = vrcp.pop %v343
    %v345 = vmul.f32 1.0, %v344
    %vm346 = vcmask 122880
    %347 = vst.msk [vmem:[#allocation9] sm:$0x1] %vm346, %v345
    // Predicated region
    $region42: #{tpu_custom_call.1} parent=1 // pred_check
      _
    $region43: #{tpu_custom_call.1} parent=1 // pred_check_branch
      %349 = sbr.rel (0) target = $region45
    $region44: #{tpu_custom_call.1} parent=1 // pred_region
      %s351 = ssub.s32 16, 16
      %352 = vsyncadd [#allocation5], %s351
      %s354 = sshll.u32 [#allocation9], 4
      %s355 = int_to_ptr.vmem [resolvable:$true] %s354
      %357 = dma.vmem_to_hbm [thread:$0]  %s355, 16, %s7, [#allocation5]
    $region45: #{tpu_custom_call.1} parent=1 // pred_fallthru
      _
    // Predicated region
    $region46: #{tpu_custom_call.1} parent=1 // pred_check
      _
    $region47: #{tpu_custom_call.1} parent=1 // pred_check_branch
      %359 = sbr.rel (0) target = $region49
    $region48: #{tpu_custom_call.1} parent=1 // pred_region
      %360 = dma.done [#allocation5], 16
    $region49: #{tpu_custom_call.1} parent=1 // pred_fallthru
      _
    %361 = vsyncpa [#allocation4], 1
    %362 = vsyncpa [#allocation7], 1
    %363 = vsyncpa [#allocation5], 1

</llo_original>
